<compile_context>
chip_gen: v7x
topology: tpu7x:2x2x1
jax: 0.10.0
libtpu: 0.0.40
codegen_flags: <defaults>
</compile_context>

<pallas_src>
import functools
import math

import jax
import jax.numpy as jnp
from jax import lax
from jax.experimental import pallas as pl
from jax.experimental.pallas import tpu as pltpu

# SuperLoss.__init__ defaults.  tau = log(C) and 1/batch_size are static
# hyper-parameters (matches the PyTorch module: it divides by self.batch_size
# and uses log(C) regardless of the runtime shapes).
DEFAULT_C = 10
DEFAULT_LAM = 1.0
DEFAULT_BATCH_SIZE = 16

_NEG_INV_E = -1.0 / math.e  # lower clamp of y = 0.5 * max(-2/e, (l_i - tau)/lam)


def _lambertw_principal(z, *, num_iters=3):
    """Real principal branch W0(z) for z >= -1/e, elementwise.

    Initial guess: branch-point series near z = -1/e, log1p(z) elsewhere.
    Halley iteration is cubically convergent, so 3 steps reach f32 precision
    from either guess (worst case is the z ~ -0.18 switch point, err ~5e-2 ->
    ~5e-4 -> ~1e-10 -> <eps).  Each step uses one exp and one approximate
    reciprocal on the EUP; the reciprocal's Newton refinement runs only on the
    final step (earlier Halley steps self-correct the reciprocal error).
    The 0/0 case at the exact branch point (num == den == 0) is neutralized by
    a tiny constant added to den, so no per-iteration compare+select is needed.
    """
    z = z.astype(jnp.float32)

    # Series around the branch point z = -1/e (accurate for z close to -1/e).
    p = jnp.sqrt(jnp.maximum(2.0 * (math.e * z + 1.0), 0.0))
    w_branch = -1.0 + p * (1.0 + p * (-1.0 / 3.0 + p * (11.0 / 72.0)))
    # log1p(z) is a good guess away from the branch point.
    w_far = jnp.log1p(z)
    w = jnp.where(z < -0.18, w_branch, w_far)

    for it in range(num_iters):
        ew = jnp.exp(w)                                  # EUP
        f = w * ew - z
        wp1 = w + 1.0
        num = 2.0 * f * wp1
        den = 2.0 * ew * wp1 * wp1 - f * (w + 2.0) + 1e-30
        inv = pl.reciprocal(den, approx=True)            # EUP vrcp
        if it == num_iters - 1:
            inv = inv * (2.0 - den * inv)                # NR refine, last step only
        w = w - num * inv
    return w


def _superloss_kernel(logits_ref, targets_ref, out_ref, *, tau, lam, inv_batch):
    # logits : (N, C) f32 -- batch on sublanes, classes on lanes.
    # targets: (N, 1) int32
    x = logits_ref[...].astype(jnp.float32)
    tgt = targets_ref[...]                               # (N, 1)

    n, c = x.shape
    class_ids = lax.broadcasted_iota(jnp.int32, (n, c), dimension=1)

    # Per-sample cross entropy: logsumexp over classes minus picked logit.
    row_max = jnp.max(x, axis=1, keepdims=True)          # (N, 1)
    lse = row_max + jnp.log(
        jnp.sum(jnp.exp(x - row_max), axis=1, keepdims=True))
    picked = jnp.sum(jnp.where(class_ids == tgt, x, 0.0),
                     axis=1, keepdims=True)
    l_i = lse - picked                                   # (N, 1)

    # y = 0.5 * max(-2/e, (l_i - tau)/lam);  w = W0(y)
    y = jnp.maximum(jnp.float32(_NEG_INV_E), (l_i - tau) * (0.5 / lam))
    w = _lambertw_principal(y)

    # sigma = exp(-W0(y)) == W0(y)/y  (identity w e^w = y), with the series
    # fallback W0(y)/y -> 1 - y as y -> 0.
    inv_y = pl.reciprocal(y, approx=True)
    inv_y = inv_y * (2.0 - y * inv_y)                    # one NR refine (VPU)
    sigma = jnp.where(jnp.abs(y) < 1e-3, 1.0 - y, w * inv_y)

    # log(sigma)**2 == w**2
    loss_i = (l_i - tau) * sigma + lam * (w * w)
    out_ref[0, 0] = jnp.sum(loss_i) * inv_batch


@functools.partial(jax.jit, static_argnames=("C", "lam", "batch_size"))
def super_loss(logits, targets, *, C=DEFAULT_C, lam=DEFAULT_LAM,
               batch_size=DEFAULT_BATCH_SIZE):
    """Forward pass of SuperLoss (matches the PyTorch module semantics)."""
    n, c = logits.shape
    tau = math.log(C)
    # NOTE: tau and 1/batch_size deliberately come from the hyper-parameters,
    # not from (n, c) -- identical to the PyTorch module's behaviour.

    targets_col = targets.astype(jnp.int32).reshape(n, 1)   # (N, 1)

    kernel = functools.partial(
        _superloss_kernel,
        tau=float(tau),
        lam=float(lam),
        inv_batch=1.0 / float(batch_size),
    )
    cost = pl.CostEstimate(
        flops=int(n * (3 * c + 30)),
        transcendentals=int(n * (c + 8)),
        bytes_accessed=int(4 * (n * c + n + 1)),
    )
    out = pl.pallas_call(
        kernel,
        out_shape=jax.ShapeDtypeStruct((1, 1), jnp.float32),
        in_specs=[
            pl.BlockSpec(memory_space=pltpu.MemorySpace.VMEM),
            pl.BlockSpec(memory_space=pltpu.MemorySpace.VMEM),
        ],
        out_specs=pl.BlockSpec(memory_space=pltpu.MemorySpace.SMEM),
        cost_estimate=cost,
        compiler_params=pltpu.CompilerParams(
            allow_input_fusion=[True, True]),
    )(logits, targets_col)
    return out[0, 0]


if __name__ == "__main__":
    key = jax.random.PRNGKey(0)
    k1, k2 = jax.random.split(key)
    N, C = DEFAULT_BATCH_SIZE, DEFAULT_C
    logits = jax.random.normal(k1, (N, C), dtype=jnp.float32) * 2.0
    targets = jax.random.randint(k2, (N,), 0, C, dtype=jnp.int32)

    loss = super_loss(logits, targets)
    jax.block_until_ready(loss)
    print("KERNEL_OK")
</pallas_src>

<mosaic_0001>
module attributes {stable_mosaic.version = 11 : i64} {
  func.func @_superloss_kernel(%arg0: memref<16x10xf32, #tpu.memory_space<vmem>>, %arg1: memref<16x1xi32, #tpu.memory_space<vmem>>, %arg2: memref<1x1xf32, #tpu.memory_space<smem>>) attributes {dimension_semantics = [], scalar_prefetch = 0 : i64, scratch_operands = 0 : i64, tpu.core_type = #tpu.core_type<tc>} {
    %c0 = arith.constant 0 : index
    %c0_0 = arith.constant 0 : index
    %0 = vector.load %arg0[%c0, %c0_0] : memref<16x10xf32, #tpu.memory_space<vmem>>, vector<16x10xf32>
    %c0_1 = arith.constant 0 : index
    %c0_2 = arith.constant 0 : index
    %1 = vector.load %arg1[%c0_1, %c0_2] : memref<16x1xi32, #tpu.memory_space<vmem>>, vector<16x1xi32>
    %2 = tpu.iota {dimensions = array<i32: 1>} : vector<16x10xi32>
    %cst = arith.constant dense<0xFF800000> : vector<16xf32>
    %3 = vector.multi_reduction <maximumf>, %0, %cst [1] : vector<16x10xf32> to vector<16xf32>
    %4 = vector.shape_cast %3 : vector<16xf32> to vector<16x1xf32>
    %5 = vector.broadcast %4 : vector<16x1xf32> to vector<16x10xf32>
    %6 = arith.subf %0, %5 : vector<16x10xf32>
    %7 = math.exp %6 : vector<16x10xf32>
    %cst_3 = arith.constant dense<0.000000e+00> : vector<16xf32>
    %8 = vector.multi_reduction <add>, %7, %cst_3 [1] : vector<16x10xf32> to vector<16xf32>
    %9 = vector.shape_cast %8 : vector<16xf32> to vector<16x1xf32>
    %10 = math.log %9 : vector<16x1xf32>
    %11 = arith.addf %4, %10 : vector<16x1xf32>
    %12 = vector.broadcast %1 : vector<16x1xi32> to vector<16x10xi32>
    %13 = arith.cmpi eq, %2, %12 : vector<16x10xi32>
    %cst_4 = arith.constant 0.000000e+00 : f32
    %14 = vector.broadcast %cst_4 : f32 to vector<16x10xf32>
    %15 = arith.select %13, %0, %14 : vector<16x10xi1>, vector<16x10xf32>
    %cst_5 = arith.constant dense<0.000000e+00> : vector<16xf32>
    %16 = vector.multi_reduction <add>, %15, %cst_5 [1] : vector<16x10xf32> to vector<16xf32>
    %17 = vector.shape_cast %16 : vector<16xf32> to vector<16x1xf32>
    %18 = arith.subf %11, %17 : vector<16x1xf32>
    %cst_6 = arith.constant 2.30258512 : f32
    %19 = vector.broadcast %cst_6 : f32 to vector<16x1xf32>
    %20 = arith.subf %18, %19 : vector<16x1xf32>
    %cst_7 = arith.constant 5.000000e-01 : f32
    %21 = vector.broadcast %cst_7 : f32 to vector<16x1xf32>
    %22 = arith.mulf %20, %21 : vector<16x1xf32>
    %cst_8 = arith.constant -0.36787945 : f32
    %23 = vector.broadcast %cst_8 : f32 to vector<16x1xf32>
    %24 = arith.maximumf %23, %22 : vector<16x1xf32>
    %cst_9 = arith.constant 2.71828175 : f32
    %25 = vector.broadcast %cst_9 : f32 to vector<16x1xf32>
    %26 = arith.mulf %25, %24 : vector<16x1xf32>
    %cst_10 = arith.constant 1.000000e+00 : f32
    %27 = vector.broadcast %cst_10 : f32 to vector<16x1xf32>
    %28 = arith.addf %26, %27 : vector<16x1xf32>
    %cst_11 = arith.constant 2.000000e+00 : f32
    %29 = vector.broadcast %cst_11 : f32 to vector<16x1xf32>
    %30 = arith.mulf %29, %28 : vector<16x1xf32>
    %cst_12 = arith.constant 0.000000e+00 : f32
    %31 = vector.broadcast %cst_12 : f32 to vector<16x1xf32>
    %32 = arith.maximumf %30, %31 : vector<16x1xf32>
    %33 = math.sqrt %32 : vector<16x1xf32>
    %cst_13 = arith.constant 0.152777776 : f32
    %34 = vector.broadcast %cst_13 : f32 to vector<16x1xf32>
    %35 = arith.mulf %33, %34 : vector<16x1xf32>
    %cst_14 = arith.constant -0.333333343 : f32
    %36 = vector.broadcast %cst_14 : f32 to vector<16x1xf32>
    %37 = arith.addf %36, %35 : vector<16x1xf32>
    %38 = arith.mulf %33, %37 : vector<16x1xf32>
    %cst_15 = arith.constant 1.000000e+00 : f32
    %39 = vector.broadcast %cst_15 : f32 to vector<16x1xf32>
    %40 = arith.addf %39, %38 : vector<16x1xf32>
    %41 = arith.mulf %33, %40 : vector<16x1xf32>
    %cst_16 = arith.constant -1.000000e+00 : f32
    %42 = vector.broadcast %cst_16 : f32 to vector<16x1xf32>
    %43 = arith.addf %42, %41 : vector<16x1xf32>
    %44 = math.log1p %24 : vector<16x1xf32>
    %cst_17 = arith.constant -1.800000e-01 : f32
    %45 = vector.broadcast %cst_17 : f32 to vector<16x1xf32>
    %46 = arith.cmpf olt, %24, %45 : vector<16x1xf32>
    %47 = arith.select %46, %43, %44 : vector<16x1xi1>, vector<16x1xf32>
    %48 = math.exp %47 : vector<16x1xf32>
    %49 = arith.mulf %47, %48 : vector<16x1xf32>
    %50 = arith.subf %49, %24 : vector<16x1xf32>
    %cst_18 = arith.constant 1.000000e+00 : f32
    %51 = vector.broadcast %cst_18 : f32 to vector<16x1xf32>
    %52 = arith.addf %47, %51 : vector<16x1xf32>
    %cst_19 = arith.constant 2.000000e+00 : f32
    %53 = vector.broadcast %cst_19 : f32 to vector<16x1xf32>
    %54 = arith.mulf %53, %50 : vector<16x1xf32>
    %55 = arith.mulf %54, %52 : vector<16x1xf32>
    %cst_20 = arith.constant 2.000000e+00 : f32
    %56 = vector.broadcast %cst_20 : f32 to vector<16x1xf32>
    %57 = arith.mulf %56, %48 : vector<16x1xf32>
    %58 = arith.mulf %57, %52 : vector<16x1xf32>
    %59 = arith.mulf %58, %52 : vector<16x1xf32>
    %cst_21 = arith.constant 2.000000e+00 : f32
    %60 = vector.broadcast %cst_21 : f32 to vector<16x1xf32>
    %61 = arith.addf %47, %60 : vector<16x1xf32>
    %62 = arith.mulf %50, %61 : vector<16x1xf32>
    %63 = arith.subf %59, %62 : vector<16x1xf32>
    %cst_22 = arith.constant 1.000000e-30 : f32
    %64 = vector.broadcast %cst_22 : f32 to vector<16x1xf32>
    %65 = arith.addf %63, %64 : vector<16x1xf32>
    %66 = tpu.reciprocal %65 {approx = true} : vector<16x1xf32> -> vector<16x1xf32>
    %67 = arith.mulf %55, %66 : vector<16x1xf32>
    %68 = arith.subf %47, %67 : vector<16x1xf32>
    %69 = math.exp %68 : vector<16x1xf32>
    %70 = arith.mulf %68, %69 : vector<16x1xf32>
    %71 = arith.subf %70, %24 : vector<16x1xf32>
    %cst_23 = arith.constant 1.000000e+00 : f32
    %72 = vector.broadcast %cst_23 : f32 to vector<16x1xf32>
    %73 = arith.addf %68, %72 : vector<16x1xf32>
    %cst_24 = arith.constant 2.000000e+00 : f32
    %74 = vector.broadcast %cst_24 : f32 to vector<16x1xf32>
    %75 = arith.mulf %74, %71 : vector<16x1xf32>
    %76 = arith.mulf %75, %73 : vector<16x1xf32>
    %cst_25 = arith.constant 2.000000e+00 : f32
    %77 = vector.broadcast %cst_25 : f32 to vector<16x1xf32>
    %78 = arith.mulf %77, %69 : vector<16x1xf32>
    %79 = arith.mulf %78, %73 : vector<16x1xf32>
    %80 = arith.mulf %79, %73 : vector<16x1xf32>
    %cst_26 = arith.constant 2.000000e+00 : f32
    %81 = vector.broadcast %cst_26 : f32 to vector<16x1xf32>
    %82 = arith.addf %68, %81 : vector<16x1xf32>
    %83 = arith.mulf %71, %82 : vector<16x1xf32>
    %84 = arith.subf %80, %83 : vector<16x1xf32>
    %cst_27 = arith.constant 1.000000e-30 : f32
    %85 = vector.broadcast %cst_27 : f32 to vector<16x1xf32>
    %86 = arith.addf %84, %85 : vector<16x1xf32>
    %87 = tpu.reciprocal %86 {approx = true} : vector<16x1xf32> -> vector<16x1xf32>
    %88 = arith.mulf %76, %87 : vector<16x1xf32>
    %89 = arith.subf %68, %88 : vector<16x1xf32>
    %90 = math.exp %89 : vector<16x1xf32>
    %91 = arith.mulf %89, %90 : vector<16x1xf32>
    %92 = arith.subf %91, %24 : vector<16x1xf32>
    %cst_28 = arith.constant 1.000000e+00 : f32
    %93 = vector.broadcast %cst_28 : f32 to vector<16x1xf32>
    %94 = arith.addf %89, %93 : vector<16x1xf32>
    %cst_29 = arith.constant 2.000000e+00 : f32
    %95 = vector.broadcast %cst_29 : f32 to vector<16x1xf32>
    %96 = arith.mulf %95, %92 : vector<16x1xf32>
    %97 = arith.mulf %96, %94 : vector<16x1xf32>
    %cst_30 = arith.constant 2.000000e+00 : f32
    %98 = vector.broadcast %cst_30 : f32 to vector<16x1xf32>
    %99 = arith.mulf %98, %90 : vector<16x1xf32>
    %100 = arith.mulf %99, %94 : vector<16x1xf32>
    %101 = arith.mulf %100, %94 : vector<16x1xf32>
    %cst_31 = arith.constant 2.000000e+00 : f32
    %102 = vector.broadcast %cst_31 : f32 to vector<16x1xf32>
    %103 = arith.addf %89, %102 : vector<16x1xf32>
    %104 = arith.mulf %92, %103 : vector<16x1xf32>
    %105 = arith.subf %101, %104 : vector<16x1xf32>
    %cst_32 = arith.constant 1.000000e-30 : f32
    %106 = vector.broadcast %cst_32 : f32 to vector<16x1xf32>
    %107 = arith.addf %105, %106 : vector<16x1xf32>
    %108 = tpu.reciprocal %107 {approx = true} : vector<16x1xf32> -> vector<16x1xf32>
    %109 = arith.mulf %107, %108 : vector<16x1xf32>
    %cst_33 = arith.constant 2.000000e+00 : f32
    %110 = vector.broadcast %cst_33 : f32 to vector<16x1xf32>
    %111 = arith.subf %110, %109 : vector<16x1xf32>
    %112 = arith.mulf %108, %111 : vector<16x1xf32>
    %113 = arith.mulf %97, %112 : vector<16x1xf32>
    %114 = arith.subf %89, %113 : vector<16x1xf32>
    %115 = tpu.reciprocal %24 {approx = true} : vector<16x1xf32> -> vector<16x1xf32>
    %116 = arith.mulf %24, %115 : vector<16x1xf32>
    %cst_34 = arith.constant 2.000000e+00 : f32
    %117 = vector.broadcast %cst_34 : f32 to vector<16x1xf32>
    %118 = arith.subf %117, %116 : vector<16x1xf32>
    %119 = arith.mulf %115, %118 : vector<16x1xf32>
    %120 = math.absf %24 : vector<16x1xf32>
    %cst_35 = arith.constant 1.000000e-03 : f32
    %121 = vector.broadcast %cst_35 : f32 to vector<16x1xf32>
    %122 = arith.cmpf olt, %120, %121 : vector<16x1xf32>
    %cst_36 = arith.constant 1.000000e+00 : f32
    %123 = vector.broadcast %cst_36 : f32 to vector<16x1xf32>
    %124 = arith.subf %123, %24 : vector<16x1xf32>
    %125 = arith.mulf %114, %119 : vector<16x1xf32>
    %126 = arith.select %122, %124, %125 : vector<16x1xi1>, vector<16x1xf32>
    %cst_37 = arith.constant 2.30258512 : f32
    %127 = vector.broadcast %cst_37 : f32 to vector<16x1xf32>
    %128 = arith.subf %18, %127 : vector<16x1xf32>
    %129 = arith.mulf %128, %126 : vector<16x1xf32>
    %130 = arith.mulf %114, %114 : vector<16x1xf32>
    %cst_38 = arith.constant 1.000000e+00 : f32
    %131 = vector.broadcast %cst_38 : f32 to vector<16x1xf32>
    %132 = arith.mulf %131, %130 : vector<16x1xf32>
    %133 = arith.addf %129, %132 : vector<16x1xf32>
    %134 = vector.shape_cast %133 : vector<16x1xf32> to vector<1x16x1xf32>
    %cst_39 = arith.constant dense<0.000000e+00> : vector<1xf32>
    %135 = vector.multi_reduction <add>, %134, %cst_39 [1, 2] : vector<1x16x1xf32> to vector<1xf32>
    %136 = vector.shape_cast %135 : vector<1xf32> to vector<1x1x1xf32>
    %137 = vector.extract %136[0, 0, 0] : f32 from vector<1x1x1xf32>
    %cst_40 = arith.constant 6.250000e-02 : f32
    %138 = arith.mulf %137, %cst_40 : f32
    %c0_41 = arith.constant 0 : index
    %c0_42 = arith.constant 0 : index
    %139 = memref.load %arg2[%c0_41, %c0_42] : memref<1x1xf32, #tpu.memory_space<smem>>
    memref.store %138, %arg2[%c0_41, %c0_42] : memref<1x1xf32, #tpu.memory_space<smem>>
    return
  }
}

</mosaic_0001>

<llo_original>
// kernel: super_loss.1
$region0: #{super_loss.1}
  #allocation0 [shape = 'u32[]', space=smem, size = 0x4, offset = 0x4, fixed_abs, tag = 'smem constant byte address 0x4 - core index']
  #allocation1 [shape = 'u32[144,128]{1,0:T(1,128)}', space=vmem, size = 0x12000, scoped, tag = 'internal scratch']
  %s0 = inlined_call_operand.vmem [shape: f32[16,10], index: 0, kind: input, shape index: {}]
  %s1 = inlined_call_operand.vmem [shape: s32[16,1], index: 1, kind: input, shape index: {}]
  %s2 = inlined_call_operand.hbm [shape: f32[1,1], index: 2, kind: output, shape index: {}]
  %s3 = sld [smem:[#allocation0]]
  $region18: #{super_loss.1} parent=0
    _
  %s5 = ssub.s32 1, %s3
  %s6 = scalar_select 0, %s5, %s3
  $region1: #{super_loss.1} parent=0
    #allocation2 [shape = 'u8[512]{0}', space=smem, size = 0x200, scoped, tag = 'output window, operand 0, single buffered']
    #allocation3 [shape = 's32[1]{0}', space=sflag, size = 0x4, scoped, tag = 'scoped memory for super_loss.1']
    %7 = vsyncpa [#allocation3], 0
    // Predicated region
    $region2: #{super_loss.1} parent=1 // pred_check
      _
    $region3: #{super_loss.1} parent=1 // pred_check_branch
      %9 = sbr.rel (0) target = $region5
    $region4: #{super_loss.1} parent=1 // pred_region
      _
    $region5: #{super_loss.1} parent=1 // pred_fallthru
      _
    // Predicated region
    $region6: #{super_loss.1} parent=1 // pred_check
      _
    $region7: #{super_loss.1} parent=1 // pred_check_branch
      %11 = sbr.rel (0) target = $region9
    $region8: #{super_loss.1} parent=1 // pred_region
      _
    $region9: #{super_loss.1} parent=1 // pred_fallthru
      _
    %v12 = vld [vmem:[%s0] sm:$0xff]
    %v13 = vld [vmem:[%s0 + $0x8] sm:$0xff]
    %v14 = vld [vmem:[%s1] sm:$0xff]
    %v15 = vld [vmem:[%s1 + $0x8] sm:$0xff]
    %v16 = vlaneseq
    %v17 = vand.u32 %v16, 127
    %vm18 = vcmask 80896
    %v19 = vsel %vm18, %v12, -inf
    %20 = vmax.xlane.f32.xlu0 %v19
    %v21 = vpop.xlane.xlu0 %20
    %v22 = vsel %vm18, %v13, -inf
    %23 = vmax.xlane.f32.xlu0 %v22
    %v24 = vpop.xlane.xlu0 %23
    %v25 = vsub.f32 %v12, %v21
    %v26 = vsub.f32 %v13, %v24
    %v27 = vmul.f32 %v25, 1.442695
    %v28 = vpow.pop %v27
    %v29 = vmul.f32 %v26, 1.442695
    %v30 = vpow.pop %v29
    %v31 = vsel %vm18, %v28, 0.0
    %32 = vadd.xlane.f32.xlu0 %v31
    %v33 = vpop.xlane.xlu0 %32
    %v34 = vsel %vm18, %v30, 0.0
    %35 = vadd.xlane.f32.xlu0 %v34
    %v36 = vpop.xlane.xlu0 %35
    %v37 = vlog2.pop %v33
    %v38 = vmul.f32 %v37, 0.6931472
    %v39 = vlog2.pop %v36
    %v40 = vmul.f32 %v39, 0.6931472
    %v41 = vadd.f32 %v21, %v38
    %v42 = vadd.f32 %v24, %v40
    %43 = vset.pattern.permute.xlu0 0
    %44 = vperm.xlu0 %43, %v14
    %v45 = vpop.permute.xlu0 %44
    %46 = vset.pattern.permute.xlu0 0
    %47 = vperm.xlu0 %46, %v15
    %v48 = vpop.permute.xlu0 %47
    %vm49 = vcmp.eq.s32.totalorder %v17, %v45
    %vm50 = vcmp.eq.s32.totalorder %v17, %v48
    %v51 = vsel %vm49, %v12, 0.0
    %v52 = vsel %vm50, %v13, 0.0
    %v53 = vsel %vm18, %v51, 0.0
    %54 = vadd.xlane.f32.xlu0 %v53
    %v55 = vpop.xlane.xlu0 %54
    %v56 = vsel %vm18, %v52, 0.0
    %57 = vadd.xlane.f32.xlu0 %v56
    %v58 = vpop.xlane.xlu0 %57
    %v59 = vsub.f32 %v41, %v55
    %v60 = vsub.f32 %v42, %v58
    %v61 = vsub.f32 %v59, 2.3025851
    %v62 = vsub.f32 %v60, 2.3025851
    %v63 = vmul.f32 %v61, 0.5
    %v64 = vmul.f32 %v62, 0.5
    %v65 = vmax.f32 %v63, -0.36787945
    %v66 = vmax.f32 %v64, -0.36787945
    %v67 = vmul.f32 %v65, 2.7182817
    %v68 = vmul.f32 %v66, 2.7182817
    %v69 = vadd.f32 %v67, 1.0
    %v70 = vadd.f32 %v68, 1.0
    %v71 = vmul.f32 %v69, 2.0
    %v72 = vmul.f32 %v70, 2.0
    %v73 = vmax.f32 %v71, 0.0
    %v74 = vmax.f32 %v72, 0.0
    %v75 = vrsqrt.pop %v73
    %v76 = vmul.f32 %v73, %v75
    %vm77 = vcmp.eq.f32.partialorder %v73, inf
    %v78 = vsel %vm77, %v73, %v76
    %vm79 = vcmp.eq.f32.partialorder %v73, 0.0
    %v80 = vand.u32 %v73, 2147483648
    %v81 = vsel %vm79, %v80, %v78
    %v82 = vrsqrt.pop %v74
    %v83 = vmul.f32 %v74, %v82
    %vm84 = vcmp.eq.f32.partialorder %v74, inf
    %v85 = vsel %vm84, %v74, %v83
    %vm86 = vcmp.eq.f32.partialorder %v74, 0.0
    %v87 = vand.u32 %v74, 2147483648
    %v88 = vsel %vm86, %v87, %v85
    %v89 = vmul.f32 %v81, 0.15277778
    %v90 = vmul.f32 %v88, 0.15277778
    %v91 = vadd.f32 %v89, -0.33333334
    %v92 = vadd.f32 %v90, -0.33333334
    %v93 = vmul.f32 %v81, %v91
    %v94 = vmul.f32 %v88, %v92
    %v95 = vadd.f32 %v93, 1.0
    %v96 = vadd.f32 %v94, 1.0
    %v97 = vmul.f32 %v81, %v95
    %v98 = vmul.f32 %v88, %v96
    %v99 = vadd.f32 %v97, -1.0
    %v100 = vadd.f32 %v98, -1.0
    %v101 = vadd.f32 %v65, 1.0
    %v102 = vlog2.pop %v101
    %v103 = vmul.f32 %v102, 0.6931472
    %v104 = vmul.f32 -0.5, %v65
    %v105 = vadd.f32 %v104, 1.0
    %v106 = vmul.f32 %v105, %v65
    %v107 = vand.u32 2147483647, %v65
    %vm108 = vcmp.lt.f32.partialorder %v107, 0.0004427343
    %v109 = vsel %vm108, %v106, %v103
    %v110 = vadd.f32 %v66, 1.0
    %v111 = vlog2.pop %v110
    %v112 = vmul.f32 %v111, 0.6931472
    %v113 = vmul.f32 -0.5, %v66
    %v114 = vadd.f32 %v113, 1.0
    %v115 = vmul.f32 %v114, %v66
    %v116 = vand.u32 2147483647, %v66
    %vm117 = vcmp.lt.f32.partialorder %v116, 0.0004427343
    %v118 = vsel %vm117, %v115, %v112
    %vm119 = vcmp.lt.f32.partialorder %v65, -0.18
    %vm120 = vcmp.lt.f32.partialorder %v66, -0.18
    %v121 = vsel %vm119, %v99, %v109
    %v122 = vsel %vm120, %v100, %v118
    %v123 = vmul.f32 %v121, 1.442695
    %v124 = vpow.pop %v123
    %v125 = vmul.f32 %v122, 1.442695
    %v126 = vpow.pop %v125
    %v127 = vmul.f32 %v121, %v124
    %v128 = vmul.f32 %v122, %v126
    %v129 = vsub.f32 %v127, %v65
    %v130 = vsub.f32 %v128, %v66
    %v131 = vadd.f32 %v121, 1.0
    %v132 = vadd.f32 %v122, 1.0
    %v133 = vmul.f32 %v129, 2.0
    %v134 = vmul.f32 %v130, 2.0
    %v135 = vmul.f32 %v133, %v131
    %v136 = vmul.f32 %v134, %v132
    %v137 = vmul.f32 %v124, 2.0
    %v138 = vmul.f32 %v126, 2.0
    %v139 = vmul.f32 %v137, %v131
    %v140 = vmul.f32 %v138, %v132
    %v141 = vmul.f32 %v139, %v131
    %v142 = vmul.f32 %v140, %v132
    %v143 = vadd.f32 %v121, 2.0
    %v144 = vadd.f32 %v122, 2.0
    %v145 = vmul.f32 %v129, %v143
    %v146 = vmul.f32 %v130, %v144
    %v147 = vsub.f32 %v141, %v145
    %v148 = vsub.f32 %v142, %v146
    %v149 = vadd.f32 %v147, 1e-30
    %v150 = vadd.f32 %v148, 1e-30
    %v151 = vrcp.pop %v149
    %v152 = vrcp.pop %v150
    %v153 = vmul.f32 %v135, %v151
    %v154 = vmul.f32 %v136, %v152
    %v155 = vsub.f32 %v121, %v153
    %v156 = vsub.f32 %v122, %v154
    %v157 = vmul.f32 %v155, 1.442695
    %v158 = vpow.pop %v157
    %v159 = vmul.f32 %v156, 1.442695
    %v160 = vpow.pop %v159
    %v161 = vmul.f32 %v155, %v158
    %v162 = vmul.f32 %v156, %v160
    %v163 = vsub.f32 %v161, %v65
    %v164 = vsub.f32 %v162, %v66
    %v165 = vadd.f32 %v155, 1.0
    %v166 = vadd.f32 %v156, 1.0
    %v167 = vmul.f32 %v163, 2.0
    %v168 = vmul.f32 %v164, 2.0
    %v169 = vmul.f32 %v167, %v165
    %v170 = vmul.f32 %v168, %v166
    %v171 = vmul.f32 %v158, 2.0
    %v172 = vmul.f32 %v160, 2.0
    %v173 = vmul.f32 %v171, %v165
    %v174 = vmul.f32 %v172, %v166
    %v175 = vmul.f32 %v173, %v165
    %v176 = vmul.f32 %v174, %v166
    %v177 = vadd.f32 %v155, 2.0
    %v178 = vadd.f32 %v156, 2.0
    %v179 = vmul.f32 %v163, %v177
    %v180 = vmul.f32 %v164, %v178
    %v181 = vsub.f32 %v175, %v179
    %v182 = vsub.f32 %v176, %v180
    %v183 = vadd.f32 %v181, 1e-30
    %v184 = vadd.f32 %v182, 1e-30
    %v185 = vrcp.pop %v183
    %v186 = vrcp.pop %v184
    %v187 = vmul.f32 %v169, %v185
    %v188 = vmul.f32 %v170, %v186
    %v189 = vsub.f32 %v155, %v187
    %v190 = vsub.f32 %v156, %v188
    %v191 = vmul.f32 %v189, 1.442695
    %v192 = vpow.pop %v191
    %v193 = vmul.f32 %v190, 1.442695
    %v194 = vpow.pop %v193
    %v195 = vmul.f32 %v189, %v192
    %v196 = vmul.f32 %v190, %v194
    %v197 = vsub.f32 %v195, %v65
    %v198 = vsub.f32 %v196, %v66
    %v199 = vadd.f32 %v189, 1.0
    %v200 = vadd.f32 %v190, 1.0
    %v201 = vmul.f32 %v197, 2.0
    %v202 = vmul.f32 %v198, 2.0
    %v203 = vmul.f32 %v201, %v199
    %v204 = vmul.f32 %v202, %v200
    %v205 = vmul.f32 %v192, 2.0
    %v206 = vmul.f32 %v194, 2.0
    %v207 = vmul.f32 %v205, %v199
    %v208 = vmul.f32 %v206, %v200
    %v209 = vmul.f32 %v207, %v199
    %v210 = vmul.f32 %v208, %v200
    %v211 = vadd.f32 %v189, 2.0
    %v212 = vadd.f32 %v190, 2.0
    %v213 = vmul.f32 %v197, %v211
    %v214 = vmul.f32 %v198, %v212
    %v215 = vsub.f32 %v209, %v213
    %v216 = vsub.f32 %v210, %v214
    %v217 = vadd.f32 %v215, 1e-30
    %v218 = vadd.f32 %v216, 1e-30
    %v219 = vrcp.pop %v217
    %v220 = vrcp.pop %v218
    %v221 = vmul.f32 %v217, %v219
    %v222 = vmul.f32 %v218, %v220
    %v223 = vsub.f32 2.0, %v221
    %v224 = vsub.f32 2.0, %v222
    %v225 = vmul.f32 %v219, %v223
    %v226 = vmul.f32 %v220, %v224
    %v227 = vmul.f32 %v203, %v225
    %v228 = vmul.f32 %v204, %v226
    %v229 = vsub.f32 %v189, %v227
    %v230 = vsub.f32 %v190, %v228
    %v231 = vrcp.pop %v65
    %v232 = vrcp.pop %v66
    %v233 = vmul.f32 %v65, %v231
    %v234 = vmul.f32 %v66, %v232
    %v235 = vsub.f32 2.0, %v233
    %v236 = vsub.f32 2.0, %v234
    %v237 = vmul.f32 %v231, %v235
    %v238 = vmul.f32 %v232, %v236
    %v239 = vand.u32 2147483647, %v65
    %v240 = vand.u32 2147483647, %v66
    %vm241 = vcmp.lt.f32.partialorder %v239, 0.001
    %vm242 = vcmp.lt.f32.partialorder %v240, 0.001
    %v243 = vsub.f32 1.0, %v65
    %v244 = vsub.f32 1.0, %v66
    %v245 = vmul.f32 %v229, %v237
    %v246 = vmul.f32 %v230, %v238
    %v247 = vsel %vm241, %v243, %v245
    %v248 = vsel %vm242, %v244, %v246
    %v249 = vmul.f32 %v61, %v247
    %v250 = vmul.f32 %v62, %v248
    %v251 = vmul.f32 %v229, %v229
    %v252 = vmul.f32 %v230, %v230
    %v253 = vadd.f32 %v249, %v251
    %v254 = vadd.f32 %v250, %v252
    %vm255 = vcmask 7168
    %v256 = vsel %vm255, %v253, 0.0
    %v257 = vsel %vm255, %v254, 0.0
    %v258 = vadd.f32 %v256, %v257
    %259 = vadd.xlane.f32.xlu0 %v258
    %v260 = vpop.xlane.xlu0 %259
    %v261 = vrot.slane %v260, 4
    %v262 = vadd.f32 %v260, %v261
    %v263 = vrot.slane %v262, 2
    %v264 = vadd.f32 %v262, %v263
    %v265 = vrot.slane %v264, 1
    %v266 = vadd.f32 %v264, %v265
    %s267 = vtos %v266
    %s268 = smul.f32 %s267, 0.0625
    %s269 = scalar_lea.smem [#allocation2], 0
    %270 = sst [smem:[%s269]] %s268
    // Predicated region
    $region10: #{super_loss.1} parent=1 // pred_check
      _
    $region11: #{super_loss.1} parent=1 // pred_check_branch
      %272 = sbr.rel (0) target = $region13
    $region12: #{super_loss.1} parent=1 // pred_region
      %s274 = ssub.s32 16, 16
      %275 = vsyncadd [#allocation3], %s274
      %278 = dma.smem_to_hbm [#allocation2], 16, %s2, [#allocation3]
    $region13: #{super_loss.1} parent=1 // pred_fallthru
      _
    // Predicated region
    $region14: #{super_loss.1} parent=1 // pred_check
      _
    $region15: #{super_loss.1} parent=1 // pred_check_branch
      %280 = sbr.rel (0) target = $region17
    $region16: #{super_loss.1} parent=1 // pred_region
      %281 = dma.done [#allocation3], 16
    $region17: #{super_loss.1} parent=1 // pred_fallthru
      _
    %282 = sfence
    %283 = vsyncpa [#allocation3], 1

</llo_original>
